<compile_context>
chip_gen: v5e
topology: v5e:2x2
jax: 0.10.0
libtpu: 0.0.40
codegen_flags: <defaults>
</compile_context>

<pallas_src>
import functools

import jax
import jax.numpy as jnp
from jax.experimental import pallas as pl
from jax.experimental.pallas import tpu as pltpu


def _round_up(n, m):
    return ((n + m - 1) // m) * m


def _mlp_kernel(x_ref, w1_ref, b1_ref, w2_ref, b2_ref, o_ref):
    # x_ref: (bb, F) bf16, w1_ref: (F, Hp) bf16  -> MXU bf16 matmul, f32 acc
    h = jnp.dot(x_ref[...], w1_ref[...], preferred_element_type=jnp.float32)
    h = jnp.maximum(h + b1_ref[...], 0.0)                      # bias + ReLU in f32
    # Second (tiny) matmul in f32: (bb, Hp) @ (Hp, Cp)
    o = jnp.dot(h, w2_ref[...], preferred_element_type=jnp.float32)
    o_ref[...] = (o + b2_ref[...]).astype(o_ref.dtype)         # lane-dense store


@functools.partial(jax.jit, static_argnames=("block_b",))
def mlp_forward(x, w1, b1, w2, b2, *, block_b=1024):
    """Fused MLP forward.  x: (B, F) f32; w1: (F, H); b1: (1, H); w2: (H, C); b2: (1, C)."""
    B, F = x.shape
    H = w1.shape[1]
    C = w2.shape[1]

    # Lane-dense padded widths (hidden and classes padded to multiples of 128).
    Hp = max(_round_up(H, 128), 128)
    Cp = max(_round_up(C, 128), 128)

    # Batch tile: as large as requested, but never larger than the (8-aligned) batch.
    bb = min(block_b, _round_up(B, 8))
    Bp = _round_up(B, bb)

    # Cast the big streaming operand (x) and W1 to bf16; pad batch / hidden / classes.
    xb = x.astype(jnp.bfloat16)
    if Bp != B:
        xb = jnp.pad(xb, ((0, Bp - B), (0, 0)))
    w1p = w1.astype(jnp.bfloat16)
    b1p = b1.astype(jnp.float32)
    if Hp != H:
        w1p = jnp.pad(w1p, ((0, 0), (0, Hp - H)))
        b1p = jnp.pad(b1p, ((0, 0), (0, Hp - H)))
    w2p = w2.astype(jnp.float32)
    b2p = b2.astype(jnp.float32)
    if Hp != H or Cp != C:
        w2p = jnp.pad(w2p, ((0, Hp - H), (0, Cp - C)))
        b2p = jnp.pad(b2p, ((0, 0), (0, Cp - C)))

    grid = (Bp // bb,)
    out_padded = pl.pallas_call(
        _mlp_kernel,
        out_shape=jax.ShapeDtypeStruct((Bp, Cp), jnp.float32),
        grid=grid,
        in_specs=[
            pl.BlockSpec((bb, F), lambda i: (i, 0)),   # x tile (streams over batch)
            pl.BlockSpec((F, Hp), lambda i: (0, 0)),   # W1 (resident)
            pl.BlockSpec((1, Hp), lambda i: (0, 0)),   # b1
            pl.BlockSpec((Hp, Cp), lambda i: (0, 0)),  # W2 (resident)
            pl.BlockSpec((1, Cp), lambda i: (0, 0)),   # b2
        ],
        out_specs=pl.BlockSpec((bb, Cp), lambda i: (i, 0)),  # lane-dense output block
        compiler_params=pltpu.CompilerParams(
            dimension_semantics=("parallel",),
        ),
    )(xb, w1p, b1p, w2p, b2p)

    return out_padded[:B, :C]


def init_mlp_params(key, feature_size=300, arch=(64,), num_classes=2):
    """Deterministic init mirroring torch.nn.Linear default (U[-1/sqrt(in), 1/sqrt(in)]).

    Weights are stored pre-transposed as (in, out) so the kernel computes y = x @ W + b.
    """
    # TODO(synk): extend fused kernel to multi-hidden-layer arch (len(arch) > 1).
    assert len(arch) == 1
    hidden = arch[0]
    k1, k2, k3, k4 = jax.random.split(key, 4)
    bound1 = 1.0 / (feature_size ** 0.5)
    bound2 = 1.0 / (hidden ** 0.5)
    w1 = jax.random.uniform(k1, (feature_size, hidden), jnp.float32, -bound1, bound1)
    b1 = jax.random.uniform(k2, (1, hidden), jnp.float32, -bound1, bound1)
    w2 = jax.random.uniform(k3, (hidden, num_classes), jnp.float32, -bound2, bound2)
    b2 = jax.random.uniform(k4, (1, num_classes), jnp.float32, -bound2, bound2)
    return w1, b1, w2, b2


if __name__ == "__main__":
    key = jax.random.PRNGKey(0)
    kx, kp = jax.random.split(key)

    feature_size, arch, num_classes = 300, (64,), 2
    batch = 8

    x = jax.random.normal(kx, (batch, feature_size), jnp.float32)
    w1, b1, w2, b2 = init_mlp_params(kp, feature_size, arch, num_classes)

    out = mlp_forward(x, w1, b1, w2, b2)
    out = jax.block_until_ready(out)
    assert out.shape == (batch, num_classes)

    # Reference check: same bf16-rounded inputs the kernel consumes, f32 math.
    xb = x.astype(jnp.bfloat16).astype(jnp.float32)
    w1b = w1.astype(jnp.bfloat16).astype(jnp.float32)
    hidden = jnp.maximum(
        jnp.dot(xb, w1b, precision=jax.lax.Precision.HIGHEST) + b1, 0.0
    )
    ref = jnp.dot(hidden, w2, precision=jax.lax.Precision.HIGHEST) + b2
    assert jnp.allclose(out, ref, atol=1e-3, rtol=1e-3), (
        f"max abs err {jnp.max(jnp.abs(out - ref))}"
    )

    print("KERNEL_OK")
</pallas_src>

<mosaic_0001>
module attributes {stable_mosaic.version = 11 : i64} {
  func.func @_mlp_kernel(%arg0: i32, %arg1: memref<8x300xbf16, #tpu.memory_space<vmem>>, %arg2: memref<300x128xbf16, #tpu.memory_space<vmem>>, %arg3: memref<1x128xf32, #tpu.memory_space<vmem>>, %arg4: memref<128x128xf32, #tpu.memory_space<vmem>>, %arg5: memref<1x128xf32, #tpu.memory_space<vmem>>, %arg6: memref<8x128xf32, #tpu.memory_space<vmem>>) attributes {dimension_semantics = [#tpu.dimension_semantics<parallel>], iteration_bounds = array<i64: 1>, scalar_prefetch = 0 : i64, scratch_operands = 0 : i64, tpu.core_type = #tpu.core_type<tc>, window_params = [{transform_indices = @transform_0, window_bounds = array<i64: 8, 300>}, {pipeline_mode = #tpu.pipeline_mode<synchronous>, transform_indices = @transform_1, window_bounds = array<i64: 300, 128>}, {pipeline_mode = #tpu.pipeline_mode<synchronous>, transform_indices = @transform_2, window_bounds = array<i64: 1, 128>}, {pipeline_mode = #tpu.pipeline_mode<synchronous>, transform_indices = @transform_3, window_bounds = array<i64: 128, 128>}, {pipeline_mode = #tpu.pipeline_mode<synchronous>, transform_indices = @transform_4, window_bounds = array<i64: 1, 128>}, {transform_indices = @transform_5, window_bounds = array<i64: 8, 128>}]} {
    %c0 = arith.constant 0 : index
    %c0_0 = arith.constant 0 : index
    %0 = vector.load %arg1[%c0, %c0_0] : memref<8x300xbf16, #tpu.memory_space<vmem>>, vector<8x300xbf16>
    %c0_1 = arith.constant 0 : index
    %c0_2 = arith.constant 0 : index
    %1 = vector.load %arg2[%c0_1, %c0_2] : memref<300x128xbf16, #tpu.memory_space<vmem>>, vector<300x128xbf16>
    %cst = arith.constant dense<0.000000e+00> : vector<8x128xf32>
    %2 = tpu.matmul %0, %1, %cst {dimension_numbers = #tpu.dot_dimension_numbers<[1], [0], [0], [1], [0, 0, 1, 1], [], []>} : vector<8x300xbf16>, vector<300x128xbf16>, vector<8x128xf32> -> vector<8x128xf32>
    %c0_3 = arith.constant 0 : index
    %c0_4 = arith.constant 0 : index
    %3 = vector.load %arg3[%c0_3, %c0_4] : memref<1x128xf32, #tpu.memory_space<vmem>>, vector<1x128xf32>
    %4 = vector.broadcast %3 : vector<1x128xf32> to vector<8x128xf32>
    %5 = arith.addf %2, %4 : vector<8x128xf32>
    %cst_5 = arith.constant 0.000000e+00 : f32
    %6 = vector.broadcast %cst_5 : f32 to vector<8x128xf32>
    %7 = arith.maximumf %5, %6 : vector<8x128xf32>
    %c0_6 = arith.constant 0 : index
    %c0_7 = arith.constant 0 : index
    %8 = vector.load %arg4[%c0_6, %c0_7] : memref<128x128xf32, #tpu.memory_space<vmem>>, vector<128x128xf32>
    %cst_8 = arith.constant dense<0.000000e+00> : vector<8x128xf32>
    %9 = tpu.matmul %7, %8, %cst_8 {dimension_numbers = #tpu.dot_dimension_numbers<[1], [0], [0], [1], [0, 0, 1, 1], [], []>} : vector<8x128xf32>, vector<128x128xf32>, vector<8x128xf32> -> vector<8x128xf32>
    %c0_9 = arith.constant 0 : index
    %c0_10 = arith.constant 0 : index
    %10 = vector.load %arg5[%c0_9, %c0_10] : memref<1x128xf32, #tpu.memory_space<vmem>>, vector<1x128xf32>
    %11 = vector.broadcast %10 : vector<1x128xf32> to vector<8x128xf32>
    %12 = arith.addf %9, %11 : vector<8x128xf32>
    %c0_11 = arith.constant 0 : index
    %c0_12 = arith.constant 0 : index
    %13 = vector.load %arg6[%c0_11, %c0_12] : memref<8x128xf32, #tpu.memory_space<vmem>>, vector<8x128xf32>
    tpu.vector_store %arg6[%c0_11, %c0_12], %12 {strides = array<i32>} : memref<8x128xf32, #tpu.memory_space<vmem>>, vector<8x128xf32>,
    return
  }
  func.func @transform_0(%arg0: i32) -> (i32, i32) {
    %c0_i32 = arith.constant 0 : i32
    %c0_i32_0 = arith.constant 0 : i32
    return %arg0, %c0_i32 : i32, i32
  }
  func.func @transform_1(%arg0: i32) -> (i32, i32) {
    %c0_i32 = arith.constant 0 : i32
    %c0_i32_0 = arith.constant 0 : i32
    %c0_i32_1 = arith.constant 0 : i32
    return %c0_i32, %c0_i32_0 : i32, i32
  }
  func.func @transform_2(%arg0: i32) -> (i32, i32) {
    %c0_i32 = arith.constant 0 : i32
    %c0_i32_0 = arith.constant 0 : i32
    %c0_i32_1 = arith.constant 0 : i32
    return %c0_i32, %c0_i32_0 : i32, i32
  }
  func.func @transform_3(%arg0: i32) -> (i32, i32) {
    %c0_i32 = arith.constant 0 : i32
    %c0_i32_0 = arith.constant 0 : i32
    %c0_i32_1 = arith.constant 0 : i32
    return %c0_i32, %c0_i32_0 : i32, i32
  }
  func.func @transform_4(%arg0: i32) -> (i32, i32) {
    %c0_i32 = arith.constant 0 : i32
    %c0_i32_0 = arith.constant 0 : i32
    %c0_i32_1 = arith.constant 0 : i32
    return %c0_i32, %c0_i32_0 : i32, i32
  }
  func.func @transform_5(%arg0: i32) -> (i32, i32) {
    %c0_i32 = arith.constant 0 : i32
    %c0_i32_0 = arith.constant 0 : i32
    return %arg0, %c0_i32 : i32, i32
  }
}

</mosaic_0001>

<llo_original>
// kernel: mlp_forward.1
$region0: #{mlp_forward.1}
  #allocation0 [shape = 'u32[]', space=smem, size = 0x4, offset = 0x4, fixed_abs, tag = 'smem constant byte address 0x4 - core index']
  #allocation1 [shape = 'u32[72,128]{1,0:T(1,128)}', space=vmem, size = 0x9000, scoped, tag = 'internal scratch']
  %s0 = inlined_call_operand.vmem [shape: bf16[8,300], index: 0, kind: input, shape index: {}]
  %s1 = inlined_call_operand.vmem [shape: bf16[300,128], index: 1, kind: input, shape index: {}]
  %s2 = inlined_call_operand.vmem [shape: f32[1,128], index: 2, kind: input, shape index: {}]
  %s3 = inlined_call_operand.vmem [shape: f32[128,128], index: 3, kind: input, shape index: {}]
  %s4 = inlined_call_operand.vmem [shape: f32[1,128], index: 4, kind: input, shape index: {}]
  %s5 = inlined_call_operand.vmem [shape: f32[8,128], index: 5, kind: output, shape index: {}]
  %s6 = sld [smem:[#allocation0]]
  $region30: #{mlp_forward.1} parent=0
    _
  %s8 = ssub.s32 1, %s6
  %s9 = scalar_select 0, %s8, %s6
  // Predicated region
  $region2: #{mlp_forward.1} parent=0 // pred_check
    _
  $region3: #{mlp_forward.1} parent=0 // pred_check_branch
    %11 = sbr.rel (0) target = $region5
  $region4: #{mlp_forward.1} parent=0 // pred_region
    _
  $region5: #{mlp_forward.1} parent=0 // pred_fallthru
    _
  // Predicated region
  $region6: #{mlp_forward.1} parent=0 // pred_check
    _
  $region7: #{mlp_forward.1} parent=0 // pred_check_branch
    %13 = sbr.rel (0) target = $region9
  $region8: #{mlp_forward.1} parent=0 // pred_region
    _
  $region9: #{mlp_forward.1} parent=0 // pred_fallthru
    _
  // Predicated region
  $region10: #{mlp_forward.1} parent=0 // pred_check
    _
  $region11: #{mlp_forward.1} parent=0 // pred_check_branch
    %15 = sbr.rel (0) target = $region13
  $region12: #{mlp_forward.1} parent=0 // pred_region
    _
  $region13: #{mlp_forward.1} parent=0 // pred_fallthru
    _
  // Predicated region
  $region14: #{mlp_forward.1} parent=0 // pred_check
    _
  $region15: #{mlp_forward.1} parent=0 // pred_check_branch
    %17 = sbr.rel (0) target = $region17
  $region16: #{mlp_forward.1} parent=0 // pred_region
    _
  $region17: #{mlp_forward.1} parent=0 // pred_fallthru
    _
  // Predicated region
  $region18: #{mlp_forward.1} parent=0 // pred_check
    _
  $region19: #{mlp_forward.1} parent=0 // pred_check_branch
    %19 = sbr.rel (0) target = $region21
  $region20: #{mlp_forward.1} parent=0 // pred_region
    _
  $region21: #{mlp_forward.1} parent=0 // pred_fallthru
    _
  %v21 = vld [vmem:[%s0] sm:$0xff]
  %v22 = vld [vmem:[%s0 + $0x8] sm:$0xf]
  %v23 = vld [vmem:[%s1] sm:$0xf]
  %v24 = vld [vmem:[%s1 + $0x4] sm:$0xf]
  %v25 = vld [vmem:[%s1 + $0x8] sm:$0xf]
  %v26 = vld [vmem:[%s1 + $0xc] sm:$0xf]
  %v27 = vld [vmem:[%s1 + $0x10] sm:$0xf]
  %v28 = vld [vmem:[%s1 + $0x14] sm:$0xf]
  %v29 = vld [vmem:[%s1 + $0x18] sm:$0xf]
  %v30 = vld [vmem:[%s1 + $0x1c] sm:$0xf]
  %v31 = vld [vmem:[%s1 + $0x20] sm:$0xf]
  %v32 = vld [vmem:[%s1 + $0x24] sm:$0xf]
  %v33 = vld [vmem:[%s1 + $0x28] sm:$0xf]
  %v34 = vld [vmem:[%s1 + $0x2c] sm:$0xf]
  %v35 = vld [vmem:[%s1 + $0x30] sm:$0xf]
  %v36 = vld [vmem:[%s1 + $0x34] sm:$0xf]
  %v37 = vld [vmem:[%s1 + $0x38] sm:$0xf]
  %v38 = vld [vmem:[%s1 + $0x3c] sm:$0xf]
  %v39 = vld [vmem:[%s1 + $0x40] sm:$0xf]
  %v40 = vld [vmem:[%s1 + $0x44] sm:$0xf]
  %v41 = vld [vmem:[%s1 + $0x48] sm:$0xf]
  %v42 = vld [vmem:[%s1 + $0x4c] sm:$0xf]
  %v43 = vld [vmem:[%s1 + $0x50] sm:$0xf]
  %v44 = vld [vmem:[%s1 + $0x54] sm:$0xf]
  %v45 = vld [vmem:[%s1 + $0x58] sm:$0xf]
  %v46 = vld [vmem:[%s1 + $0x5c] sm:$0xf]
  %v47 = vld [vmem:[%s1 + $0x60] sm:$0xf]
  %v48 = vld [vmem:[%s1 + $0x64] sm:$0xf]
  %v49 = vld [vmem:[%s1 + $0x68] sm:$0xf]
  %v50 = vld [vmem:[%s1 + $0x6c] sm:$0xf]
  %v51 = vld [vmem:[%s1 + $0x70] sm:$0xf]
  %v52 = vld [vmem:[%s1 + $0x74] sm:$0xf]
  %v53 = vld [vmem:[%s1 + $0x78] sm:$0xf]
  %v54 = vld [vmem:[%s1 + $0x7c] sm:$0xf]
  %v55 = vld [vmem:[%s1 + $0x80] sm:$0xf]
  %v56 = vld [vmem:[%s1 + $0x84] sm:$0xf]
  %v57 = vld [vmem:[%s1 + $0x88] sm:$0xf]
  %v58 = vld [vmem:[%s1 + $0x8c] sm:$0xf]
  %v59 = vld [vmem:[%s1 + $0x90] sm:$0xf]
  %v60 = vld [vmem:[%s1 + $0x94] sm:$0x3]
  %v61 = vld [vmem:[%s2] sm:$0x1]
  %v63 = vperm.slane %v61, 0
  %v67 = vunpack.c.l.b16 %v21
  %v68 = vunpack.c.h.b16 %v21
  %v69 = vunpack.c.l.b16 %v22
  %v70 = vpack.c.b16 %v67, %v67
  %v71 = vpack.c.b16 %v68, %v68
  %v72 = vpack.c.b16 %v69, %v69
  %v113 = vunpack.c.l.b16 %v23
  %v114 = vunpack.c.l.b16 %v24
  %v115 = vunpack.c.l.b16 %v25
  %v116 = vunpack.c.l.b16 %v26
  %v117 = vunpack.c.l.b16 %v27
  %v118 = vunpack.c.l.b16 %v28
  %v119 = vunpack.c.l.b16 %v29
  %v120 = vunpack.c.l.b16 %v30
  %v121 = vunpack.c.l.b16 %v31
  %v122 = vunpack.c.l.b16 %v32
  %v123 = vunpack.c.l.b16 %v33
  %v124 = vunpack.c.l.b16 %v34
  %v125 = vunpack.c.l.b16 %v35
  %v126 = vunpack.c.l.b16 %v36
  %v127 = vunpack.c.l.b16 %v37
  %v128 = vunpack.c.l.b16 %v38
  %v129 = vunpack.c.l.b16 %v39
  %v130 = vunpack.c.l.b16 %v40
  %v131 = vunpack.c.l.b16 %v41
  %v132 = vunpack.c.l.b16 %v42
  %v133 = vunpack.c.l.b16 %v43
  %v134 = vunpack.c.l.b16 %v44
  %v135 = vunpack.c.l.b16 %v45
  %v136 = vunpack.c.l.b16 %v46
  %v137 = vunpack.c.l.b16 %v47
  %v138 = vunpack.c.l.b16 %v48
  %v139 = vunpack.c.l.b16 %v49
  %v140 = vunpack.c.l.b16 %v50
  %v141 = vunpack.c.l.b16 %v51
  %v142 = vunpack.c.l.b16 %v52
  %v143 = vunpack.c.l.b16 %v53
  %v144 = vunpack.c.l.b16 %v54
  %v145 = vunpack.c.l.b16 %v55
  %v146 = vunpack.c.l.b16 %v56
  %v147 = vunpack.c.l.b16 %v57
  %v148 = vunpack.c.l.b16 %v58
  %v149 = vunpack.c.l.b16 %v59
  %v150 = vunpack.c.l.b16 %v60
  %v151 = vpack.c.b16 %v114, %v113
  %v152 = vpack.c.b16 %v116, %v115
  %v153 = vpack.c.b16 %v118, %v117
  %v154 = vpack.c.b16 %v120, %v119
  %v155 = vpack.c.b16 %v122, %v121
  %v156 = vpack.c.b16 %v124, %v123
  %v157 = vpack.c.b16 %v126, %v125
  %v158 = vpack.c.b16 %v128, %v127
  %v159 = vpack.c.b16 %v130, %v129
  %v160 = vpack.c.b16 %v132, %v131
  %v161 = vpack.c.b16 %v134, %v133
  %v162 = vpack.c.b16 %v136, %v135
  %v163 = vpack.c.b16 %v138, %v137
  %v164 = vpack.c.b16 %v140, %v139
  %v165 = vpack.c.b16 %v142, %v141
  %v166 = vpack.c.b16 %v144, %v143
  %v167 = vpack.c.b16 %v146, %v145
  %v168 = vpack.c.b16 %v148, %v147
  %v169 = vpack.c.b16 %v150, %v149
  %vm188 = vcmask 359424
  %v190 = vsel %vm188, %v72, 0
  %vm192 = vcmask 1045504
  %v194 = vsel %vm192, %v169, 0
  %196 = vmatpush.bf16.msra.mxu0 %v158
  %197 = vmatpush.bf16.msra.mxu0 %v157
  %198 = vmatpush.bf16.msra.mxu0 %v156
  %199 = vmatpush.bf16.msra.mxu0 %v155
  %200 = vmatpush.bf16.msra.mxu0 %v154
  %201 = vmatpush.bf16.msra.mxu0 %v153
  %202 = vmatpush.bf16.msra.mxu0 %v152
  %203 = vmatpush.bf16.msra.mxu0 %v151
  %204 = vmatmul.bf16.gmra.mxu0 %v70
  %v205 = vpop.f32.mrf.mxu0
  %v206 = vadd.f32 %v63, %v205
  %v207 = vpop.f32.mrf.mxu0
  %208 = vdwg.mxu0
  %209 = vmatpush.bf16.msra.mxu0 %v166
  %210 = vmatpush.bf16.msra.mxu0 %v165
  %211 = vmatpush.bf16.msra.mxu0 %v164
  %212 = vmatpush.bf16.msra.mxu0 %v163
  %213 = vmatpush.bf16.msra.mxu0 %v162
  %214 = vmatpush.bf16.msra.mxu0 %v161
  %215 = vmatpush.bf16.msra.mxu0 %v160
  %216 = vmatpush.bf16.msra.mxu0 %v159
  %217 = vmatmul.bf16.gmra.mxu0 %v71
  %v218 = vpop.f32.mrf.mxu0
  %v219 = vadd.f32 %v206, %v218
  %v220 = vpop.f32.mrf.mxu0
  %221 = vdwg.mxu0
  %222 = vmatpush.bf16.msra.mxu0 0
  %223 = vmatpush.bf16.msra.mxu0 0
  %224 = vmatpush.bf16.msra.mxu0 0
  %225 = vmatpush.bf16.msra.mxu0 0
  %226 = vmatpush.bf16.msra.mxu0 0
  %227 = vmatpush.bf16.msra.mxu0 %v194
  %228 = vmatpush.bf16.msra.mxu0 %v168
  %229 = vmatpush.bf16.msra.mxu0 %v167
  %230 = vmatmul.bf16.gmra.mxu0 %v190
  %v231 = vpop.f32.mrf.mxu0
  %v232 = vadd.f32 %v219, %v231
  %v233 = vpop.f32.mrf.mxu0
  %234 = vdwg.mxu0
  %v235 = vmax.f32 %v232, 0.0
  %v236 = vld [vmem:[%s3] sm:$0xff]
  %v237 = vld [vmem:[%s3 + $0x8] sm:$0xff]
  %v238 = vld [vmem:[%s3 + $0x10] sm:$0xff]
  %v239 = vld [vmem:[%s3 + $0x18] sm:$0xff]
  %v240 = vld [vmem:[%s3 + $0x20] sm:$0xff]
  %v241 = vld [vmem:[%s3 + $0x28] sm:$0xff]
  %v242 = vld [vmem:[%s3 + $0x30] sm:$0xff]
  %v243 = vld [vmem:[%s3 + $0x38] sm:$0xff]
  %v244 = vld [vmem:[%s3 + $0x40] sm:$0xff]
  %v245 = vld [vmem:[%s3 + $0x48] sm:$0xff]
  %v246 = vld [vmem:[%s3 + $0x50] sm:$0xff]
  %v247 = vld [vmem:[%s3 + $0x58] sm:$0xff]
  %v248 = vld [vmem:[%s3 + $0x60] sm:$0xff]
  %v249 = vld [vmem:[%s3 + $0x68] sm:$0xff]
  %v250 = vld [vmem:[%s3 + $0x70] sm:$0xff]
  %v251 = vld [vmem:[%s3 + $0x78] sm:$0xff]
  %v252 = vld [vmem:[%s4] sm:$0x1]
  %v254 = vperm.slane %v252, 0
  %256 = vmatpush.msra.mxu0 %v251
  %257 = vmatpush.msra.mxu0 %v250
  %258 = vmatpush.msra.mxu0 %v249
  %259 = vmatpush.msra.mxu0 %v248
  %260 = vmatpush.msra.mxu0 %v247
  %261 = vmatpush.msra.mxu0 %v246
  %262 = vmatpush.msra.mxu0 %v245
  %263 = vmatpush.msra.mxu0 %v244
  %264 = vmatpush.msra.mxu0 %v243
  %265 = vmatpush.msra.mxu0 %v242
  %266 = vmatpush.msra.mxu0 %v241
  %267 = vmatpush.msra.mxu0 %v240
  %268 = vmatpush.msra.mxu0 %v239
  %269 = vmatpush.msra.mxu0 %v238
  %270 = vmatpush.msra.mxu0 %v237
  %271 = vmatpush.msra.mxu0 %v236
  %272 = vmatmul.f32.gmra.mxu0 %v235
  %v273 = vpop.f32.mrf.mxu0
  %v274 = vadd.f32 %v254, %v273
  %275 = vdwg.mxu0
  %276 = vst [vmem:[%s5] sm:$0xff] %v274
  // Predicated region
  $region22: #{mlp_forward.1} parent=0 // pred_check
    _
  $region23: #{mlp_forward.1} parent=0 // pred_check_branch
    %278 = sbr.rel (0) target = $region25
  $region24: #{mlp_forward.1} parent=0 // pred_region
    _
  $region25: #{mlp_forward.1} parent=0 // pred_fallthru
    _
  // Predicated region
  $region26: #{mlp_forward.1} parent=0 // pred_check
    _
  $region27: #{mlp_forward.1} parent=0 // pred_check_branch
    %280 = sbr.rel (0) target = $region29
  $region28: #{mlp_forward.1} parent=0 // pred_region
    _
  $region29: #{mlp_forward.1} parent=0 // pred_fallthru
    _

</llo_original>
